<compile_context>
chip_gen: v7x
topology: tpu7x:2x2x1
jax: 0.10.0
libtpu: 0.0.40
codegen_flags: <defaults>
</compile_context>

<pallas_src>
import functools

import jax
import jax.numpy as jnp
import numpy as np
from jax.experimental import pallas as pl
from jax.experimental.pallas import tpu as pltpu


def _pick_tile(dim, pref):
    """Preferred tile when it divides `dim`, else fall back to the full dim."""
    return pref if (dim >= pref and dim % pref == 0) else dim


# ---------------------------------------------------------------------------
# Tiled matmul kernel (qkv / r projections)
# ---------------------------------------------------------------------------

def _matmul_kernel(x_ref, w_ref, o_ref, acc_ref):
    @pl.when(pl.program_id(2) == 0)
    def _():
        acc_ref[...] = jnp.zeros_like(acc_ref)

    # Native-dtype operands straight to the MXU, f32 accumulation.
    acc_ref[...] += jnp.dot(x_ref[...], w_ref[...],
                            preferred_element_type=jnp.float32)

    @pl.when(pl.program_id(2) == pl.num_programs(2) - 1)
    def _():
        o_ref[...] = acc_ref[...].astype(o_ref.dtype)


def _pallas_matmul(x, w, *, out_dtype=None, tm=256, tn=256, tk=512):
    m, k = x.shape
    k2, n = w.shape
    assert k == k2
    out_dtype = out_dtype or x.dtype
    tm, tn, tk = _pick_tile(m, tm), _pick_tile(n, tn), _pick_tile(k, tk)
    return pl.pallas_call(
        _matmul_kernel,
        out_shape=jax.ShapeDtypeStruct((m, n), out_dtype),
        grid=(m // tm, n // tn, k // tk),
        in_specs=[pl.BlockSpec((tm, tk), lambda i, j, kk: (i, kk)),
                  pl.BlockSpec((tk, tn), lambda i, j, kk: (kk, j))],
        out_specs=pl.BlockSpec((tm, tn), lambda i, j, kk: (i, j)),
        scratch_shapes=[pltpu.VMEM((tm, tn), jnp.float32)],
        compiler_params=pltpu.CompilerParams(
            dimension_semantics=("parallel", "parallel", "arbitrary")),
    )(x, w)


# ---------------------------------------------------------------------------
# Fused relative attention kernel (all heads of one batch element per step)
# ---------------------------------------------------------------------------

def _rel_attn_kernel(qkv_ref, rk_ref, o_ref, *, n_head, d_head, qlen, klen, scale):
    n_hd = n_head * d_head
    qkv = qkv_ref[0]                      # [qlen, 3*n_hd]  (native dtype)
    rk = rk_ref[...]                      # [klen, n_hd]

    # Causal mask built in-kernel (VPU iota + compare; no mask input).
    row = jax.lax.broadcasted_iota(jnp.int32, (qlen, klen), 0)
    col = jax.lax.broadcasted_iota(jnp.int32, (qlen, klen), 1)
    masked = col > row                    # klen == qlen (mems=None)
    mask_value = float(jnp.finfo(jnp.float32).min) / 2.0

    def dot_nt(a, b):                     # a[m,d] . b[n,d]^T -> [m,n], f32 acc
        return jax.lax.dot_general(a, b, (((1,), (1,)), ((), ())),
                                   preferred_element_type=jnp.float32)

    outs = []
    for h in range(n_head):
        q_h = qkv[:, h * d_head:(h + 1) * d_head] * scale          # fold scale into q
        k_h = qkv[:, n_hd + h * d_head: n_hd + (h + 1) * d_head]
        v_h = qkv[:, 2 * n_hd + h * d_head: 2 * n_hd + (h + 1) * d_head]
        rk_h = rk[:, h * d_head:(h + 1) * d_head]

        ac = dot_nt(q_h, k_h)             # [qlen, klen]   content term
        bd_raw = dot_nt(q_h, rk_h)        # [qlen, klen]   position term (unshifted)

        # _rel_shift band extraction: bd[i, j] = bd_raw[i, (klen-1-i) + j].
        # Indices landing in the zero pad correspond to j > i, which the causal
        # mask removes, so this matches PyTorch's pad/reshape _rel_shift on the
        # kept entries.
        if qlen > 1:
            bd_ext = jnp.concatenate(
                [bd_raw, jnp.zeros((qlen, qlen - 1), jnp.float32)], axis=1)
        else:
            bd_ext = bd_raw
        bd = jnp.concatenate(
            [bd_ext[i:i + 1, klen - 1 - i: 2 * klen - 1 - i] for i in range(qlen)],
            axis=0)
        # TODO(synk): at production qlen, replace this O(qlen) band extraction with a
        # single strided pltpu.roll and tile the kernel flash-style over qlen/klen.

        score = jnp.where(masked, mask_value, ac + bd)
        score = score - jnp.max(score, axis=-1, keepdims=True)
        p = jnp.exp(score)
        denom = jnp.sum(p, axis=-1, keepdims=True)
        r0 = pl.reciprocal(denom, approx=True)      # EUP slot (cheap)
        r1 = r0 * (2.0 - denom * r0)                # one Newton step -> ~f32-exact
        p = p * r1
        outs.append(jnp.dot(p.astype(v_h.dtype), v_h,
                            preferred_element_type=jnp.float32))

    # One lane-dense [qlen, n_head*d_head] store (no masked d_head-wide writes).
    o_ref[0] = jnp.concatenate(outs, axis=1).astype(o_ref.dtype)


# ---------------------------------------------------------------------------
# o_net projection + residual + post-LayerNorm (pre_lnorm=False), row-tiled
# ---------------------------------------------------------------------------

def _out_proj_ln_kernel(attn_ref, wo_ref, res_ref, g_ref, b_ref, o_ref, *, eps):
    proj = jnp.dot(attn_ref[...], wo_ref[...], preferred_element_type=jnp.float32)
    x = proj + res_ref[...].astype(jnp.float32)
    mu = jnp.mean(x, axis=-1, keepdims=True)
    xc = x - mu
    var = jnp.mean(xc * xc, axis=-1, keepdims=True)
    y = xc * jax.lax.rsqrt(var + eps)
    o_ref[...] = (y * g_ref[...].astype(jnp.float32)
                  + b_ref[...].astype(jnp.float32)).astype(o_ref.dtype)


# ---------------------------------------------------------------------------
# Forward wrapper
# ---------------------------------------------------------------------------

def rel_multihead_attn(w, r, params, *, n_head, d_head, attn_mask=None, eps=1e-5):
    """RelMultiHeadAttn forward.  w:[qlen,bsz,d_model], r:[rlen,d_model]."""
    qlen, bsz, d_model = w.shape
    rlen = r.shape[0]
    klen = qlen                                   # mems=None -> klen == qlen
    assert rlen == klen
    if attn_mask is not None:
        # TODO(synk): only the built-in causal mask is supported; the rel_shift band
        # extraction is only valid for causal(-or-stricter) masking.
        raise NotImplementedError("custom attn_mask not supported; causal mask is built in")
    n_hd = n_head * d_head

    w_qkv = params["w_qkv"]          # [3*n_hd, d_model]  (nn.Linear weight)
    w_o = params["w_o"]              # [d_model, n_hd]
    gamma = params["gamma"]          # [d_model]
    beta = params["beta"]            # [d_model]

    # Batch-major rows so attention blocks, the residual and the output all share
    # the same lane-dense [rows, features] layout.
    x2d = w.transpose(1, 0, 2).reshape(bsz * qlen, d_model)

    qkv2d = _pallas_matmul(x2d, w_qkv.T, out_dtype=w.dtype)          # [bsz*qlen, 3*n_hd]
    qkv = qkv2d.reshape(bsz, qlen, 3 * n_hd)
    # TODO(synk): r_net / r_w_bias / r_r_bias live in the RelPartialLearnable subclass;
    # here r is projected with the K-slice of qkv_net and biases are zero.
    rk = _pallas_matmul(r, w_qkv[n_hd:2 * n_hd, :].T, out_dtype=w.dtype)   # [rlen, n_hd]

    kernel = functools.partial(_rel_attn_kernel, n_head=n_head, d_head=d_head,
                               qlen=qlen, klen=klen, scale=1.0 / (d_head ** 0.5))
    attn = pl.pallas_call(
        kernel,
        out_shape=jax.ShapeDtypeStruct((bsz, qlen, n_hd), w.dtype),
        grid=(bsz,),
        in_specs=[
            pl.BlockSpec((1, qlen, 3 * n_hd), lambda b: (b, 0, 0)),   # per-batch qkv slab
            pl.BlockSpec((rlen, n_hd), lambda b: (0, 0)),             # constant -> DMA'd once
        ],
        out_specs=pl.BlockSpec((1, qlen, n_hd), lambda b: (b, 0, 0)),
        compiler_params=pltpu.CompilerParams(dimension_semantics=("parallel",)),
    )(qkv, rk)

    attn2d = attn.reshape(bsz * qlen, n_hd)

    m = bsz * qlen
    tm = _pick_tile(m, 256)
    out2d = pl.pallas_call(
        functools.partial(_out_proj_ln_kernel, eps=eps),
        out_shape=jax.ShapeDtypeStruct((m, d_model), w.dtype),
        grid=(m // tm,),
        in_specs=[pl.BlockSpec((tm, n_hd), lambda i: (i, 0)),
                  pl.BlockSpec((n_hd, d_model), lambda i: (0, 0)),    # weight resident
                  pl.BlockSpec((tm, d_model), lambda i: (i, 0)),      # residual
                  pl.BlockSpec((1, d_model), lambda i: (0, 0)),
                  pl.BlockSpec((1, d_model), lambda i: (0, 0))],
        out_specs=pl.BlockSpec((tm, d_model), lambda i: (i, 0)),
        compiler_params=pltpu.CompilerParams(dimension_semantics=("parallel",)),
    )(attn2d, w_o.T, x2d, gamma.reshape(1, d_model), beta.reshape(1, d_model))

    return out2d.reshape(bsz, qlen, d_model).transpose(1, 0, 2)


# ---------------------------------------------------------------------------
# Pure-JAX reference (mirrors the PyTorch math incl. exact _rel_shift)
# ---------------------------------------------------------------------------

def reference_forward(w, r, params, n_head, d_head):
    qlen, bsz, d_model = w.shape
    klen = qlen
    n_hd = n_head * d_head
    w_qkv, w_o = params["w_qkv"], params["w_o"]
    gamma, beta = params["gamma"], params["beta"]

    heads = (w.reshape(-1, d_model) @ w_qkv.T).reshape(qlen, bsz, 3 * n_hd)
    q, k, v = jnp.split(heads, 3, axis=-1)
    r_k = (r @ w_qkv.T)[:, n_hd:2 * n_hd]

    q = q.reshape(qlen, bsz, n_head, d_head)
    k = k.reshape(klen, bsz, n_head, d_head)
    v = v.reshape(klen, bsz, n_head, d_head)
    rk = r_k.reshape(klen, n_head, d_head)

    ac = jnp.einsum('ibnd,jbnd->ijbn', q, k)
    bd = jnp.einsum('ibnd,jnd->ijbn', q, rk)
    # exact PyTorch _rel_shift (pad -> reshape -> drop -> reshape)
    zero_pad = jnp.zeros((qlen, 1, bsz, n_head), bd.dtype)
    bdp = jnp.concatenate([zero_pad, bd], axis=1).reshape(klen + 1, qlen, bsz, n_head)
    bd = bdp[1:].reshape(qlen, klen, bsz, n_head)

    score = (ac + bd) / (d_head ** 0.5)
    ii = jnp.arange(qlen)[:, None]
    jj = jnp.arange(klen)[None, :]
    mask = (jj > ii)[:, :, None, None]
    score = jnp.where(mask, -1e30, score)
    prob = jax.nn.softmax(score, axis=1)

    attn_vec = jnp.einsum('ijbn,jbnd->ibnd', prob, v).reshape(qlen, bsz, n_hd)
    attn_out = attn_vec @ w_o.T
    x = w + attn_out
    mu = x.mean(-1, keepdims=True)
    var = ((x - mu) ** 2).mean(-1, keepdims=True)
    return (x - mu) / jnp.sqrt(var + 1e-5) * gamma + beta


# ---------------------------------------------------------------------------

if __name__ == "__main__":
    n_head, d_head, d_model = 4, 8, 32
    qlen, bsz = 8, 2

    key = jax.random.PRNGKey(0)
    k1, k2, k3, k4 = jax.random.split(key, 4)
    params = {
        "w_qkv": 0.05 * jax.random.normal(k1, (3 * n_head * d_head, d_model), jnp.float32),
        "w_o": 0.05 * jax.random.normal(k2, (d_model, n_head * d_head), jnp.float32),
        "gamma": jnp.ones((d_model,), jnp.float32),   # nn.LayerNorm default init
        "beta": jnp.zeros((d_model,), jnp.float32),
    }
    w = jax.random.normal(k3, (qlen, bsz, d_model), jnp.float32)
    r = jax.random.normal(k4, (qlen, d_model), jnp.float32)

    out = rel_multihead_attn(w, r, params, n_head=n_head, d_head=d_head)
    out = jax.block_until_ready(out)

    ref = reference_forward(w, r, params, n_head, d_head)
    assert out.shape == (qlen, bsz, d_model)
    np.testing.assert_allclose(np.asarray(out), np.asarray(ref), rtol=2e-4, atol=2e-4)
    print("KERNEL_OK")
</pallas_src>

<mosaic_0001>
module attributes {stable_mosaic.version = 11 : i64} {
  func.func @_matmul_kernel(%arg0: i32, %arg1: i32, %arg2: i32, %arg3: memref<16x32xf32, #tpu.memory_space<vmem>>, %arg4: memref<32x96xf32, #tpu.memory_space<vmem>>, %arg5: memref<16x96xf32, #tpu.memory_space<vmem>>, %arg6: memref<16x96xf32, #tpu.memory_space<vmem>>) attributes {dimension_semantics = [#tpu.dimension_semantics<parallel>, #tpu.dimension_semantics<parallel>, #tpu.dimension_semantics<arbitrary>], iteration_bounds = array<i64: 1, 1, 1>, scalar_prefetch = 0 : i64, scratch_operands = 1 : i64, tpu.core_type = #tpu.core_type<tc>, window_params = [{transform_indices = @transform_0, window_bounds = array<i64: 16, 32>}, {transform_indices = @transform_1, window_bounds = array<i64: 32, 96>}, {transform_indices = @transform_2, window_bounds = array<i64: 16, 96>}]} {
    %c0_i32 = arith.constant 0 : i32
    %0 = arith.cmpi eq, %arg2, %c0_i32 : i32
    %1 = arith.extui %0 : i1 to i32
    %c0_i32_0 = arith.constant 0 : i32
    %2 = arith.cmpi ne, %1, %c0_i32_0 : i32
    scf.if %2 {
      %cst_10 = arith.constant 0.000000e+00 : f32
      %12 = vector.broadcast %cst_10 : f32 to vector<16x96xf32>
      %c0_11 = arith.constant 0 : index
      %c0_12 = arith.constant 0 : index
      %13 = vector.load %arg6[%c0_11, %c0_12] : memref<16x96xf32, #tpu.memory_space<vmem>>, vector<16x96xf32>
      tpu.vector_store %arg6[%c0_11, %c0_12], %12 {strides = array<i32>} : memref<16x96xf32, #tpu.memory_space<vmem>>, vector<16x96xf32>,
    } else {
    }
    %c0 = arith.constant 0 : index
    %c0_1 = arith.constant 0 : index
    %3 = vector.load %arg6[%c0, %c0_1] : memref<16x96xf32, #tpu.memory_space<vmem>>, vector<16x96xf32>
    %c0_2 = arith.constant 0 : index
    %c0_3 = arith.constant 0 : index
    %4 = vector.load %arg3[%c0_2, %c0_3] : memref<16x32xf32, #tpu.memory_space<vmem>>, vector<16x32xf32>
    %c0_4 = arith.constant 0 : index
    %c0_5 = arith.constant 0 : index
    %5 = vector.load %arg4[%c0_4, %c0_5] : memref<32x96xf32, #tpu.memory_space<vmem>>, vector<32x96xf32>
    %cst = arith.constant dense<0.000000e+00> : vector<16x96xf32>
    %6 = tpu.matmul %4, %5, %cst {dimension_numbers = #tpu.dot_dimension_numbers<[1], [0], [0], [1], [0, 0, 1, 1], [], []>} : vector<16x32xf32>, vector<32x96xf32>, vector<16x96xf32> -> vector<16x96xf32>
    %7 = arith.addf %3, %6 : vector<16x96xf32>
    %c0_6 = arith.constant 0 : index
    %c0_7 = arith.constant 0 : index
    %8 = vector.load %arg6[%c0_6, %c0_7] : memref<16x96xf32, #tpu.memory_space<vmem>>, vector<16x96xf32>
    tpu.vector_store %arg6[%c0_6, %c0_7], %7 {strides = array<i32>} : memref<16x96xf32, #tpu.memory_space<vmem>>, vector<16x96xf32>,
    %c0_i32_8 = arith.constant 0 : i32
    %9 = arith.cmpi eq, %arg2, %c0_i32_8 : i32
    %10 = arith.extui %9 : i1 to i32
    %c0_i32_9 = arith.constant 0 : i32
    %11 = arith.cmpi ne, %10, %c0_i32_9 : i32
    scf.if %11 {
      %c0_10 = arith.constant 0 : index
      %c0_11 = arith.constant 0 : index
      %12 = vector.load %arg6[%c0_10, %c0_11] : memref<16x96xf32, #tpu.memory_space<vmem>>, vector<16x96xf32>
      %c0_12 = arith.constant 0 : index
      %c0_13 = arith.constant 0 : index
      %13 = vector.load %arg5[%c0_12, %c0_13] : memref<16x96xf32, #tpu.memory_space<vmem>>, vector<16x96xf32>
      tpu.vector_store %arg5[%c0_12, %c0_13], %12 {strides = array<i32>} : memref<16x96xf32, #tpu.memory_space<vmem>>, vector<16x96xf32>,
    } else {
    }
    return
  }
  func.func @transform_0(%arg0: i32, %arg1: i32, %arg2: i32) -> (i32, i32) {
    %c0_i32 = arith.constant 0 : i32
    return %arg0, %arg2 : i32, i32
  }
  func.func @transform_1(%arg0: i32, %arg1: i32, %arg2: i32) -> (i32, i32) {
    %c0_i32 = arith.constant 0 : i32
    return %arg2, %arg1 : i32, i32
  }
  func.func @transform_2(%arg0: i32, %arg1: i32, %arg2: i32) -> (i32, i32) {
    %c0_i32 = arith.constant 0 : i32
    return %arg0, %arg1 : i32, i32
  }
}

</mosaic_0001>

<llo_original>
// kernel: tpu_custom_call.1
$region0: #{tpu_custom_call.1}
  #allocation0 [shape = 'u32[]', space=smem, size = 0x4, offset = 0x4, fixed_abs, tag = 'smem constant byte address 0x4 - core index']
  #allocation1 [shape = 'u32[144,128]{1,0:T(1,128)}', space=vmem, size = 0x12000, scoped, tag = 'internal scratch']
  #allocation2 [shape = 'f32[16,96]{1,0:T(8,128)}', space=vmem, size = 0x2000, scoped, tag = 'scratch operand']
  %s0 = inlined_call_operand.hbm [shape: f32[16,32], index: 0, kind: input, shape index: {}]
  %s1 = inlined_call_operand.hbm [shape: f32[32,96], index: 1, kind: input, shape index: {}]
  %s2 = inlined_call_operand.hbm [shape: f32[16,96], index: 2, kind: output, shape index: {}]
  %s3 = sld [smem:[#allocation0]]
  $region34: #{tpu_custom_call.1} parent=0
    _
  %s5 = ssub.s32 1, %s3
  %s6 = scalar_select 0, %s5, %s3
  $region1: #{tpu_custom_call.1} parent=0
    #allocation3 [shape = 'u8[8192]{0}', space=vmem, size = 0x2000, scoped, tag = 'input window, operand 0, single buffered']
    #allocation4 [shape = 's32[1]{0}', space=sflag, size = 0x4, scoped, tag = 'scoped memory for tpu_custom_call.1']
    #allocation5 [shape = 's32[1]{0}', space=sflag, size = 0x4, scoped, tag = 'scoped memory for tpu_custom_call.1']
    #allocation6 [shape = 'u8[16384]{0}', space=vmem, size = 0x4000, scoped, tag = 'input window, operand 1, single buffered']
    #allocation7 [shape = 's32[1]{0}', space=sflag, size = 0x4, scoped, tag = 'scoped memory for tpu_custom_call.1']
    #allocation8 [shape = 'u8[8192]{0}', space=vmem, size = 0x2000, scoped, tag = 'output window, operand 0, single buffered']
    %7 = vsyncpa [#allocation4], 0
    %8 = vsyncpa [#allocation7], 0
    %9 = vsyncpa [#allocation5], 0
    // Predicated region
    $region2: #{tpu_custom_call.1} parent=1 // pred_check
      _
    $region3: #{tpu_custom_call.1} parent=1 // pred_check_branch
      %11 = sbr.rel (0) target = $region5
    $region4: #{tpu_custom_call.1} parent=1 // pred_region
      %s13 = ssub.s32 256, 256
      %14 = vsyncadd [#allocation4], %s13
      %s15 = sshll.u32 [#allocation3], 4
      %s16 = int_to_ptr.vmem [resolvable:$true] %s15
      %21 = dma.hbm_to_vmem [thread:$0]  %s0, 256, %s16, [#allocation4], 128, 128, 8
    $region5: #{tpu_custom_call.1} parent=1 // pred_fallthru
      _
    // Predicated region
    $region6: #{tpu_custom_call.1} parent=1 // pred_check
      _
    $region7: #{tpu_custom_call.1} parent=1 // pred_check_branch
      %23 = sbr.rel (0) target = $region9
    $region8: #{tpu_custom_call.1} parent=1 // pred_region
      %s25 = ssub.s32 512, 512
      %26 = vsyncadd [#allocation7], %s25
      %s27 = sshll.u32 [#allocation6], 4
      %s28 = int_to_ptr.vmem [resolvable:$true] %s27
      %33 = dma.hbm_to_vmem [thread:$0]  %s1, 512, %s28, [#allocation7], 128, 128, 8
    $region9: #{tpu_custom_call.1} parent=1 // pred_fallthru
      _
    // Predicated region
    $region10: #{tpu_custom_call.1} parent=1 // pred_check
      _
    $region11: #{tpu_custom_call.1} parent=1 // pred_check_branch
      %35 = sbr.rel (0) target = $region13
    $region12: #{tpu_custom_call.1} parent=1 // pred_region
      %36 = dma.done [#allocation4], 256
    $region13: #{tpu_custom_call.1} parent=1 // pred_fallthru
      _
    // Predicated region
    $region14: #{tpu_custom_call.1} parent=1 // pred_check
      _
    $region15: #{tpu_custom_call.1} parent=1 // pred_check_branch
      %38 = sbr.rel (0) target = $region17
    $region16: #{tpu_custom_call.1} parent=1 // pred_region
      %39 = dma.done [#allocation7], 512
    $region17: #{tpu_custom_call.1} parent=1 // pred_fallthru
      _
    %p40 = scmp.eq.s32.totalorder 0, 0
    // Predicated region
    $region18: #{tpu_custom_call.1} parent=1 // pred_check
      %p41 = pneg %p40
    $region19: #{tpu_custom_call.1} parent=1 // pred_check_branch
      %43 = sbr.rel (%p41) target = $region21
    $region20: #{tpu_custom_call.1} parent=1 // pred_region
      %vm44 = vcmask 785408
      %45 = vst.msk [vmem:[#allocation2] sm:$0xff] %vm44, 0.0
      %46 = vst.msk [vmem:[#allocation2 + $0x8] sm:$0xff] %vm44, 0.0
    $region21: #{tpu_custom_call.1} parent=1 // pred_fallthru
      _
    %v47 = vld [vmem:[#allocation2] sm:$0xff]
    %v48 = vld [vmem:[#allocation2 + $0x8] sm:$0xff]
    %v49 = vld [vmem:[#allocation3] sm:$0xff]
    %v50 = vld [vmem:[#allocation3 + $0x8] sm:$0xff]
    %v51 = vld [vmem:[#allocation6] sm:$0xff]
    %v52 = vld [vmem:[#allocation6 + $0x8] sm:$0xff]
    %v53 = vld [vmem:[#allocation6 + $0x10] sm:$0xff]
    %v54 = vld [vmem:[#allocation6 + $0x18] sm:$0xff]
    %vm55 = vcmask 261120
    %v57 = vsel %vm55, %v49, 0
    %v60 = vsel %vm55, %v50, 0
    %62 = vmatprep.subr.mxu0 0.0
    %63 = vmatpush1.msra.mxu0 %v51
    %64 = vmatprep.subr.mxu0 0.0
    %65 = vmatpush1.msra.mxu0 %v52
    %66 = vmatprep.subr.mxu0 0.0
    %67 = vmatpush1.msra.mxu0 %v53
    %68 = vmatprep.subr.mxu0 0.0
    %69 = vmatpush1.msra.mxu0 %v54
    %70 = vmatprep.subr.mxu0 0.0
    %71 = vmatpush1.msra.mxu0 0.0
    %72 = vmatprep.subr.mxu0 0.0
    %73 = vmatpush1.msra.mxu0 0.0
    %74 = vmatprep.subr.mxu0 0.0
    %75 = vmatpush1.msra.mxu0 0.0
    %76 = vmatprep.subr.mxu0 0.0
    %77 = vmatpush1.msra.mxu0 0.0
    %78 = vmatprep.subr.mxu0 0.0
    %79 = vmatpush1.msra.mxu0 0.0
    %80 = vmatprep.subr.mxu0 0.0
    %81 = vmatpush1.msra.mxu0 0.0
    %82 = vmatprep.subr.mxu0 0.0
    %83 = vmatpush1.msra.mxu0 0.0
    %84 = vmatprep.subr.mxu0 0.0
    %85 = vmatpush1.msra.mxu0 0.0
    %86 = vmatprep.subr.mxu0 0.0
    %87 = vmatpush1.msra.mxu0 0.0
    %88 = vmatprep.subr.mxu0 0.0
    %89 = vmatpush1.msra.mxu0 0.0
    %90 = vmatprep.subr.mxu0 0.0
    %91 = vmatpush1.msra.mxu0 0.0
    %92 = vmatprep.subr.mxu0 0.0
    %93 = vmatpush1.msra.mxu0 0.0
    %94 = vmatprep.subr.mxu0 0.0
    %95 = vmatpush1.msra.mxu0 0.0
    %96 = vmatprep.subr.mxu0 0.0
    %97 = vmatpush1.msra.mxu0 0.0
    %98 = vmatprep.subr.mxu0 0.0
    %99 = vmatpush1.msra.mxu0 0.0
    %100 = vmatprep.subr.mxu0 0.0
    %101 = vmatpush1.msra.mxu0 0.0
    %102 = vmatprep.subr.mxu0 0.0
    %103 = vmatpush1.msra.mxu0 0.0
    %104 = vmatprep.subr.mxu0 0.0
    %105 = vmatpush1.msra.mxu0 0.0
    %106 = vmatprep.subr.mxu0 0.0
    %107 = vmatpush1.msra.mxu0 0.0
    %108 = vmatprep.subr.mxu0 0.0
    %109 = vmatpush1.msra.mxu0 0.0
    %110 = vmatprep.subr.mxu0 0.0
    %111 = vmatpush1.msra.mxu0 0.0
    %112 = vmatprep.subr.mxu0 0.0
    %113 = vmatpush1.msra.mxu0 0.0
    %114 = vmatprep.subr.mxu0 0.0
    %115 = vmatpush1.msra.mxu0 0.0
    %116 = vmatprep.subr.mxu0 0.0
    %117 = vmatpush1.msra.mxu0 0.0
    %118 = vmatprep.subr.mxu0 0.0
    %119 = vmatpush1.msra.mxu0 0.0
    %120 = vmatprep.subr.mxu0 0.0
    %121 = vmatpush1.msra.mxu0 0.0
    %122 = vmatprep.subr.mxu0 0.0
    %123 = vmatpush1.msra.mxu0 0.0
    %124 = vmatprep.subr.mxu0 0.0
    %125 = vmatpush1.msra.mxu0 0.0
    %126 = vmatprep.mubr.f32.mxu0 0.0
    %127 = vmatmul.mubr.f32.gmra.mrb[0].mxu0 %v57
    %v128 = vpop.f32.mrb[0].mxu0
    %v129 = vadd.f32 0.0, %v128
    %v130 = vpop.f32.mrb[0].mxu0
    %131 = vmatprep.mubr.f32.mxu0 0.0
    %132 = vmatmul.mubr.f32.gmra.mrb[0].mxu0 %v60
    %v133 = vpop.f32.mrb[0].mxu0
    %v134 = vadd.f32 0.0, %v133
    %v135 = vpop.f32.mrb[0].mxu0
    %136 = vdwg.mxu0
    %v137 = vadd.f32 %v47, %v129
    %v138 = vadd.f32 %v48, %v134
    %vm139 = vcmask 785408
    %140 = vst.msk [vmem:[#allocation2] sm:$0xff] %vm139, %v137
    %141 = vst.msk [vmem:[#allocation2 + $0x8] sm:$0xff] %vm139, %v138
    // Predicated region
    $region22: #{tpu_custom_call.1} parent=1 // pred_check
      %p142 = pneg %p40
    $region23: #{tpu_custom_call.1} parent=1 // pred_check_branch
      %144 = sbr.rel (%p142) target = $region25
    $region24: #{tpu_custom_call.1} parent=1 // pred_region
      %v145 = vld [vmem:[#allocation2] sm:$0xff]
      %v146 = vld [vmem:[#allocation2 + $0x8] sm:$0xff]
      %147 = vst.msk [vmem:[#allocation8] sm:$0xff] %vm139, %v145
      %148 = vst.msk [vmem:[#allocation8 + $0x8] sm:$0xff] %vm139, %v146
    $region25: #{tpu_custom_call.1} parent=1 // pred_fallthru
      _
    // Predicated region
    $region26: #{tpu_custom_call.1} parent=1 // pred_check
      _
    $region27: #{tpu_custom_call.1} parent=1 // pred_check_branch
      %150 = sbr.rel (0) target = $region29
    $region28: #{tpu_custom_call.1} parent=1 // pred_region
      %s152 = ssub.s32 256, 256
      %153 = vsyncadd [#allocation5], %s152
      %s154 = sshll.u32 [#allocation8], 4
      %s155 = int_to_ptr.vmem [resolvable:$true] %s154
      %160 = dma.vmem_to_hbm [thread:$0]  %s155, 256, %s2, [#allocation5], 128, 128, 8
    $region29: #{tpu_custom_call.1} parent=1 // pred_fallthru
      _
    // Predicated region
    $region30: #{tpu_custom_call.1} parent=1 // pred_check
      _
    $region31: #{tpu_custom_call.1} parent=1 // pred_check_branch
      %162 = sbr.rel (0) target = $region33
    $region32: #{tpu_custom_call.1} parent=1 // pred_region
      %163 = dma.done [#allocation5], 256
    $region33: #{tpu_custom_call.1} parent=1 // pred_fallthru
      _
    %164 = vsyncpa [#allocation4], 1
    %165 = vsyncpa [#allocation7], 1
    %166 = vsyncpa [#allocation5], 1

</llo_original>
